<compile_context>
chip_gen: v5e
topology: v5e:2x2
jax: 0.10.0
libtpu: 0.0.40
codegen_flags: <defaults>
</compile_context>

<pallas_src>
import jax
import jax.numpy as jnp
from jax import lax
from jax.experimental import pallas as pl
from jax.experimental.pallas import tpu as pltpu


def make_banded_conv_relu_kernel(KH, M):
    """'same' conv (stride 1) + bias + ReLU as KH banded MXU matmuls."""

    def kernel(x_ref, w_ref, b_ref, o_ref):
        # x_ref: (M + KH - 1, Wp*Cin) f32   row-major padded input slab
        # w_ref: (KH, Wp*Cin, W*Cout) bf16  block-banded weights (one per kh)
        # b_ref: (1, W*Cout)          f32   bias tiled per output column block
        # o_ref: (M, W*Cout)          f32   lane-dense output (512 = 4*128)
        acc = jnp.dot(x_ref[0:M, :].astype(jnp.bfloat16), w_ref[0],
                      preferred_element_type=jnp.float32)
        for kh in range(1, KH):
            acc = acc + jnp.dot(x_ref[kh:kh + M, :].astype(jnp.bfloat16),
                                w_ref[kh],
                                preferred_element_type=jnp.float32)
        o_ref[...] = jnp.maximum(acc + b_ref[...], 0.0).astype(o_ref.dtype)

    return kernel


def _build_banded_weights(w_oihw, W, Wp):
    """OIHW conv weights -> (KH, Wp*Cin, W*Cout) block-banded bf16 matrices.

    W_band[kh][iw*Cin + ci, ow*Cout + co] = w[co, ci, kh, iw - ow]
    for 0 <= iw - ow < KW, and 0 elsewhere.
    """
    Cout, Cin, KH, KW = w_oihw.shape
    w_hwio = jnp.transpose(w_oihw, (2, 3, 1, 0))            # (KH, KW, Cin, Cout)
    ow = jnp.arange(W)
    band = jnp.zeros((KH, W, Wp, Cin, Cout), jnp.float32)
    for kw in range(KW):
        band = band.at[:, ow, ow + kw].set(w_hwio[:, kw][:, None])
    w_band = jnp.transpose(band, (0, 2, 3, 1, 4)).reshape(KH, Wp * Cin, W * Cout)
    return w_band.astype(jnp.bfloat16)


def simsiam_forward(x_nchw, w_oihw, bias):
    """Pallas implementation of SimSiam.forward: backbone(x).flatten(start_dim=1)."""
    B, Cin, H, W = x_nchw.shape
    Cout, _, KH, KW = w_oihw.shape
    pad_h, pad_w = KH // 2, KW // 2
    Hp, Wp = H + 2 * pad_h, W + 2 * pad_w
    N = W * Cout                       # lane-dense output width (multiple of 128)

    # Fold batch into matmul rows: one kernel step, M rows (8-aligned).
    M_valid = B * Hp
    M = ((M_valid + 7) // 8) * 8
    Rtot = M + KH - 1                  # input rows incl. kh-shift slack

    # Input glue: NCHW -> NHWC, 'same' pad, fold (W, Cin) onto lanes, fold batch
    # into rows, append zero rows so every kh-shifted slice is in bounds.
    # TODO(synk): at realistic sizes cast x_rows to bf16 here to halve input DMA.
    x_nhwc = jnp.transpose(x_nchw, (0, 2, 3, 1))
    x_pad = jnp.pad(x_nhwc, ((0, 0), (pad_h, pad_h), (pad_w, pad_w), (0, 0)))
    x_rows = x_pad.reshape(B * Hp, Wp * Cin)
    x_rows = jnp.pad(x_rows, ((0, Rtot - B * Hp), (0, 0)))

    w_band = _build_banded_weights(w_oihw, W, Wp)
    b_row = jnp.tile(bias.astype(jnp.float32), W).reshape(1, N)

    kernel = make_banded_conv_relu_kernel(KH, M)

    out_rows = pl.pallas_call(
        kernel,
        out_shape=jax.ShapeDtypeStruct((M, N), jnp.float32),
        grid_spec=pltpu.PrefetchScalarGridSpec(
            num_scalar_prefetch=0,
            grid=(1,),
            in_specs=[
                pl.BlockSpec((Rtot, Wp * Cin), lambda i: (0, 0)),
                pl.BlockSpec((KH, Wp * Cin, N), lambda i: (0, 0, 0)),
                pl.BlockSpec((1, N), lambda i: (0, 0)),
            ],
            out_specs=pl.BlockSpec((M, N), lambda i: (0, 0)),
        ),
        compiler_params=pltpu.CompilerParams(
            dimension_semantics=("arbitrary",),
        ),
    )(x_rows, w_band, b_row)

    # Drop the per-batch seam rows and row-alignment padding, un-pack the
    # lane-major (W, Cout), reorder to NCHW, then flatten(start_dim=1).
    feat = out_rows[:B * Hp].reshape(B, Hp, W, Cout)[:, :H]
    feat_nchw = jnp.transpose(feat, (0, 3, 1, 2))
    return feat_nchw.reshape(B, Cout * H * W)


def reference_forward(x_nchw, w_oihw, bias):
    """Pure-JAX f32 reference matching the PyTorch backbone + flatten."""
    y = lax.conv_general_dilated(
        x_nchw, w_oihw,
        window_strides=(1, 1),
        padding="SAME",
        dimension_numbers=("NCHW", "OIHW", "NCHW"),
    )
    y = jnp.maximum(y + bias.reshape(1, -1, 1, 1), 0.0)
    return y.reshape(y.shape[0], -1)


if __name__ == "__main__":
    B, Cin, H, W = 2, 4, 16, 16
    Cout, KH, KW = 32, 3, 3

    key = jax.random.PRNGKey(0)
    k_x, k_w, k_b = jax.random.split(key, 3)
    x = jax.random.normal(k_x, (B, Cin, H, W), dtype=jnp.float32)
    w = jax.random.normal(k_w, (Cout, Cin, KH, KW), dtype=jnp.float32) * 0.1
    b = jax.random.normal(k_b, (Cout,), dtype=jnp.float32) * 0.1

    out = jax.block_until_ready(simsiam_forward(x, w, b))
    ref = jax.block_until_ready(reference_forward(x, w, b))

    assert out.shape == (B, Cout * H * W), out.shape
    # bf16 MXU operands (f32 accumulation) -> loosen tolerance vs f32 reference.
    assert jnp.allclose(out, ref, atol=5e-2, rtol=5e-2), "mismatch vs reference"
    print("KERNEL_OK")
</pallas_src>

<mosaic_0001>
module attributes {stable_mosaic.version = 11 : i64} {
  func.func @kernel(%arg0: i32, %arg1: memref<42x72xf32, #tpu.memory_space<vmem>>, %arg2: memref<3x72x512xbf16, #tpu.memory_space<vmem>>, %arg3: memref<1x512xf32, #tpu.memory_space<vmem>>, %arg4: memref<40x512xf32, #tpu.memory_space<vmem>>) attributes {dimension_semantics = [#tpu.dimension_semantics<arbitrary>], iteration_bounds = array<i64: 1>, scalar_prefetch = 0 : i64, scratch_operands = 0 : i64, tpu.core_type = #tpu.core_type<tc>, window_params = [{pipeline_mode = #tpu.pipeline_mode<synchronous>, transform_indices = @transform_0, window_bounds = array<i64: 42, 72>}, {pipeline_mode = #tpu.pipeline_mode<synchronous>, transform_indices = @transform_1, window_bounds = array<i64: 3, 72, 512>}, {pipeline_mode = #tpu.pipeline_mode<synchronous>, transform_indices = @transform_2, window_bounds = array<i64: 1, 512>}, {pipeline_mode = #tpu.pipeline_mode<synchronous>, transform_indices = @transform_3, window_bounds = array<i64: 40, 512>}]} {
    %c0 = arith.constant 0 : index
    %c0_0 = arith.constant 0 : index
    %0 = vector.load %arg1[%c0, %c0_0] : memref<42x72xf32, #tpu.memory_space<vmem>>, vector<40x72xf32>
    %1 = arith.truncf %0 : vector<40x72xf32> to vector<40x72xbf16>
    %c0_1 = arith.constant 0 : index
    %c0_2 = arith.constant 0 : index
    %c0_3 = arith.constant 0 : index
    %2 = vector.load %arg2[%c0_1, %c0_2, %c0_3] : memref<3x72x512xbf16, #tpu.memory_space<vmem>>, vector<1x72x512xbf16>
    %3 = vector.shape_cast %2 : vector<1x72x512xbf16> to vector<72x512xbf16>
    %cst = arith.constant dense<0.000000e+00> : vector<40x512xf32>
    %4 = tpu.matmul %1, %3, %cst {dimension_numbers = #tpu.dot_dimension_numbers<[1], [0], [0], [1], [0, 0, 1, 1], [], []>} : vector<40x72xbf16>, vector<72x512xbf16>, vector<40x512xf32> -> vector<40x512xf32>
    %c1 = arith.constant 1 : index
    %c0_4 = arith.constant 0 : index
    %5 = vector.load %arg1[%c1, %c0_4] : memref<42x72xf32, #tpu.memory_space<vmem>>, vector<40x72xf32>
    %6 = arith.truncf %5 : vector<40x72xf32> to vector<40x72xbf16>
    %c1_5 = arith.constant 1 : index
    %c0_6 = arith.constant 0 : index
    %c0_7 = arith.constant 0 : index
    %7 = vector.load %arg2[%c1_5, %c0_6, %c0_7] : memref<3x72x512xbf16, #tpu.memory_space<vmem>>, vector<1x72x512xbf16>
    %8 = vector.shape_cast %7 : vector<1x72x512xbf16> to vector<72x512xbf16>
    %cst_8 = arith.constant dense<0.000000e+00> : vector<40x512xf32>
    %9 = tpu.matmul %6, %8, %cst_8 {dimension_numbers = #tpu.dot_dimension_numbers<[1], [0], [0], [1], [0, 0, 1, 1], [], []>} : vector<40x72xbf16>, vector<72x512xbf16>, vector<40x512xf32> -> vector<40x512xf32>
    %10 = arith.addf %4, %9 : vector<40x512xf32>
    %c2 = arith.constant 2 : index
    %c0_9 = arith.constant 0 : index
    %11 = vector.load %arg1[%c2, %c0_9] : memref<42x72xf32, #tpu.memory_space<vmem>>, vector<40x72xf32>
    %12 = arith.truncf %11 : vector<40x72xf32> to vector<40x72xbf16>
    %c2_10 = arith.constant 2 : index
    %c0_11 = arith.constant 0 : index
    %c0_12 = arith.constant 0 : index
    %13 = vector.load %arg2[%c2_10, %c0_11, %c0_12] : memref<3x72x512xbf16, #tpu.memory_space<vmem>>, vector<1x72x512xbf16>
    %14 = vector.shape_cast %13 : vector<1x72x512xbf16> to vector<72x512xbf16>
    %cst_13 = arith.constant dense<0.000000e+00> : vector<40x512xf32>
    %15 = tpu.matmul %12, %14, %cst_13 {dimension_numbers = #tpu.dot_dimension_numbers<[1], [0], [0], [1], [0, 0, 1, 1], [], []>} : vector<40x72xbf16>, vector<72x512xbf16>, vector<40x512xf32> -> vector<40x512xf32>
    %16 = arith.addf %10, %15 : vector<40x512xf32>
    %c0_14 = arith.constant 0 : index
    %c0_15 = arith.constant 0 : index
    %17 = vector.load %arg3[%c0_14, %c0_15] : memref<1x512xf32, #tpu.memory_space<vmem>>, vector<1x512xf32>
    %18 = vector.broadcast %17 : vector<1x512xf32> to vector<40x512xf32>
    %19 = arith.addf %16, %18 : vector<40x512xf32>
    %cst_16 = arith.constant 0.000000e+00 : f32
    %20 = vector.broadcast %cst_16 : f32 to vector<40x512xf32>
    %21 = arith.maximumf %19, %20 : vector<40x512xf32>
    %c0_17 = arith.constant 0 : index
    %c0_18 = arith.constant 0 : index
    %22 = vector.load %arg4[%c0_17, %c0_18] : memref<40x512xf32, #tpu.memory_space<vmem>>, vector<40x512xf32>
    tpu.vector_store %arg4[%c0_17, %c0_18], %21 {strides = array<i32>} : memref<40x512xf32, #tpu.memory_space<vmem>>, vector<40x512xf32>,
    return
  }
  func.func @transform_0(%arg0: i32) -> (i32, i32) {
    %c0_i32 = arith.constant 0 : i32
    %c0_i32_0 = arith.constant 0 : i32
    %c0_i32_1 = arith.constant 0 : i32
    return %c0_i32, %c0_i32_0 : i32, i32
  }
  func.func @transform_1(%arg0: i32) -> (i32, i32, i32) {
    %c0_i32 = arith.constant 0 : i32
    %c0_i32_0 = arith.constant 0 : i32
    %c0_i32_1 = arith.constant 0 : i32
    %c0_i32_2 = arith.constant 0 : i32
    return %c0_i32, %c0_i32_0, %c0_i32_1 : i32, i32, i32
  }
  func.func @transform_2(%arg0: i32) -> (i32, i32) {
    %c0_i32 = arith.constant 0 : i32
    %c0_i32_0 = arith.constant 0 : i32
    %c0_i32_1 = arith.constant 0 : i32
    return %c0_i32, %c0_i32_0 : i32, i32
  }
  func.func @transform_3(%arg0: i32) -> (i32, i32) {
    %c0_i32 = arith.constant 0 : i32
    %c0_i32_0 = arith.constant 0 : i32
    %c0_i32_1 = arith.constant 0 : i32
    return %c0_i32, %c0_i32_0 : i32, i32
  }
}

</mosaic_0001>

<llo_original>
// kernel: tpu_custom_call.1
$region0: #{tpu_custom_call.1}
  #allocation0 [shape = 'u32[]', space=smem, size = 0x4, offset = 0x4, fixed_abs, tag = 'smem constant byte address 0x4 - core index']
  #allocation1 [shape = 'u32[72,128]{1,0:T(1,128)}', space=vmem, size = 0x9000, scoped, tag = 'internal scratch']
  %s0 = inlined_call_operand.hbm [shape: f32[42,72], index: 0, kind: input, shape index: {}]
  %s1 = inlined_call_operand.hbm [shape: bf16[3,72,512], index: 1, kind: input, shape index: {}]
  %s2 = inlined_call_operand.hbm [shape: f32[1,512], index: 2, kind: input, shape index: {}]
  %s3 = inlined_call_operand.hbm [shape: f32[40,512], index: 3, kind: output, shape index: {}]
  %s4 = sld [smem:[#allocation0]]
  $region34: #{tpu_custom_call.1} parent=0
    _
  %s6 = ssub.s32 1, %s4
  %s7 = scalar_select 0, %s6, %s4
  $region1: #{tpu_custom_call.1} parent=0
    #allocation2 [shape = 'u8[24576]{0}', space=vmem, size = 0x6000, scoped, tag = 'input window, operand 0, single buffered']
    #allocation3 [shape = 's32[1]{0}', space=sflag, size = 0x4, scoped, tag = 'scoped memory for tpu_custom_call.1']
    #allocation4 [shape = 's32[1]{0}', space=sflag, size = 0x4, scoped, tag = 'scoped memory for tpu_custom_call.1']
    #allocation5 [shape = 'u8[221184]{0}', space=vmem, size = 0x36000, scoped, tag = 'input window, operand 1, single buffered']
    #allocation6 [shape = 's32[1]{0}', space=sflag, size = 0x4, scoped, tag = 'scoped memory for tpu_custom_call.1']
    #allocation7 [shape = 'u8[2048]{0}', space=vmem, size = 0x800, scoped, tag = 'input window, operand 2, single buffered']
    #allocation8 [shape = 'u8[81920]{0}', space=vmem, size = 0x14000, scoped, tag = 'output window, operand 0, single buffered']
    %8 = vsyncpa [#allocation3], 0
    %9 = vsyncpa [#allocation6], 0
    %10 = vsyncpa [#allocation4], 0
    // Predicated region
    $region2: #{tpu_custom_call.1} parent=1 // pred_check
      _
    $region3: #{tpu_custom_call.1} parent=1 // pred_check_branch
      %12 = sbr.rel (0) target = $region5
    $region4: #{tpu_custom_call.1} parent=1 // pred_region
      %14 = vsyncadd [#allocation3], 0
      %s15 = sshll.u32 %s0, 4
      %s16 = int_to_ptr.hbm [resolvable:$true] %s15
      %s17 = sshll.u32 [#allocation2], 4
      %s18 = int_to_ptr.vmem [resolvable:$true] %s17
      %23 = dma.hbm_to_vmem [thread:$0]  %s16, 768, %s18, [#allocation3], 128, 128, 8
    $region5: #{tpu_custom_call.1} parent=1 // pred_fallthru
      _
    // Predicated region
    $region6: #{tpu_custom_call.1} parent=1 // pred_check
      _
    $region7: #{tpu_custom_call.1} parent=1 // pred_check_branch
      %25 = sbr.rel (0) target = $region9
    $region8: #{tpu_custom_call.1} parent=1 // pred_region
      %27 = vsyncadd [#allocation6], 0
      %s28 = sshll.u32 %s1, 4
      %s29 = int_to_ptr.hbm [resolvable:$true] %s28
      %s30 = sshll.u32 [#allocation5], 4
      %s31 = int_to_ptr.vmem [resolvable:$true] %s30
      %36 = dma.hbm_to_vmem [thread:$0]  %s29, 6912, %s31, [#allocation6], 256, 256, 16
    $region9: #{tpu_custom_call.1} parent=1 // pred_fallthru
      _
    // Predicated region
    $region10: #{tpu_custom_call.1} parent=1 // pred_check
      _
    $region11: #{tpu_custom_call.1} parent=1 // pred_check_branch
      %38 = sbr.rel (0) target = $region13
    $region12: #{tpu_custom_call.1} parent=1 // pred_region
      %40 = vsyncadd [#allocation6], 0
      %s42 = sshll.u32 %s2, 4
      %s43 = int_to_ptr.hbm [resolvable:$true] %s42
      %s44 = sshll.u32 [#allocation7], 4
      %s45 = int_to_ptr.vmem [resolvable:$true] %s44
      %47 = dma.hbm_to_vmem [thread:$0]  %s43, 64, %s45, [#allocation6]
    $region13: #{tpu_custom_call.1} parent=1 // pred_fallthru
      _
    // Predicated region
    $region14: #{tpu_custom_call.1} parent=1 // pred_check
      _
    $region15: #{tpu_custom_call.1} parent=1 // pred_check_branch
      %49 = sbr.rel (0) target = $region17
    $region16: #{tpu_custom_call.1} parent=1 // pred_region
      %51 = dma.done [#allocation3], 768
    $region17: #{tpu_custom_call.1} parent=1 // pred_fallthru
      _
    // Predicated region
    $region18: #{tpu_custom_call.1} parent=1 // pred_check
      _
    $region19: #{tpu_custom_call.1} parent=1 // pred_check_branch
      %53 = sbr.rel (0) target = $region21
    $region20: #{tpu_custom_call.1} parent=1 // pred_region
      %55 = dma.done [#allocation6], 6912
    $region21: #{tpu_custom_call.1} parent=1 // pred_fallthru
      _
    // Predicated region
    $region22: #{tpu_custom_call.1} parent=1 // pred_check
      _
    $region23: #{tpu_custom_call.1} parent=1 // pred_check_branch
      %57 = sbr.rel (0) target = $region25
    $region24: #{tpu_custom_call.1} parent=1 // pred_region
      %59 = dma.done [#allocation6], 64
    $region25: #{tpu_custom_call.1} parent=1 // pred_fallthru
      _
    %v61 = vld [vmem:[#allocation2] sm:$0xff]
    %v62 = vld [vmem:[#allocation2 + $0x8] sm:$0xff]
    %v63 = vld [vmem:[#allocation2 + $0x10] sm:$0xff]
    %v64 = vld [vmem:[#allocation2 + $0x18] sm:$0xff]
    %v65 = vld [vmem:[#allocation2 + $0x20] sm:$0xff]
    %v66 = vpack.c.bf16 %v62, %v61
    %v67 = vpack.c.bf16 %v64, %v63
    %v68 = vpack.c.bf16 %v65, %v65
    %v69 = vld [vmem:[#allocation5] sm:$0xff]
    %v70 = vld [vmem:[#allocation5 + $0x8] sm:$0xff]
    %v71 = vld [vmem:[#allocation5 + $0x10] sm:$0xff]
    %v72 = vld [vmem:[#allocation5 + $0x18] sm:$0xff]
    %v73 = vld [vmem:[#allocation5 + $0x20] sm:$0xff]
    %v74 = vld [vmem:[#allocation5 + $0x28] sm:$0xff]
    %v75 = vld [vmem:[#allocation5 + $0x30] sm:$0xff]
    %v76 = vld [vmem:[#allocation5 + $0x38] sm:$0xff]
    %v77 = vld [vmem:[#allocation5 + $0x40] sm:$0xff]
    %v78 = vld [vmem:[#allocation5 + $0x48] sm:$0xff]
    %v79 = vld [vmem:[#allocation5 + $0x50] sm:$0xff]
    %v80 = vld [vmem:[#allocation5 + $0x58] sm:$0xff]
    %v81 = vld [vmem:[#allocation5 + $0x60] sm:$0xff]
    %v82 = vld [vmem:[#allocation5 + $0x68] sm:$0xff]
    %v83 = vld [vmem:[#allocation5 + $0x70] sm:$0xff]
    %v84 = vld [vmem:[#allocation5 + $0x78] sm:$0xff]
    %v85 = vld [vmem:[#allocation5 + $0x80] sm:$0xff]
    %v86 = vld [vmem:[#allocation5 + $0x88] sm:$0xff]
    %v87 = vld [vmem:[#allocation2 + $0x1] sm:$0xff]
    %v88 = vld [vmem:[#allocation2 + $0x9] sm:$0xff]
    %v89 = vld [vmem:[#allocation2 + $0x11] sm:$0xff]
    %v90 = vld [vmem:[#allocation2 + $0x19] sm:$0xff]
    %v91 = vld [vmem:[#allocation2 + $0x21] sm:$0xff]
    %v92 = vpack.c.bf16 %v88, %v87
    %v93 = vpack.c.bf16 %v90, %v89
    %v94 = vpack.c.bf16 %v91, %v91
    %s95 = scalar_lea.vmem [#allocation5], 144
    %v96 = vld [vmem:[%s95] sm:$0xff]
    %v97 = vld [vmem:[%s95 + $0x8] sm:$0xff]
    %v98 = vld [vmem:[%s95 + $0x10] sm:$0xff]
    %v99 = vld [vmem:[%s95 + $0x18] sm:$0xff]
    %v100 = vld [vmem:[%s95 + $0x20] sm:$0xff]
    %v101 = vld [vmem:[%s95 + $0x28] sm:$0xff]
    %v102 = vld [vmem:[%s95 + $0x30] sm:$0xff]
    %v103 = vld [vmem:[%s95 + $0x38] sm:$0xff]
    %v104 = vld [vmem:[%s95 + $0x40] sm:$0xff]
    %v105 = vld [vmem:[%s95 + $0x48] sm:$0xff]
    %v106 = vld [vmem:[%s95 + $0x50] sm:$0xff]
    %v107 = vld [vmem:[%s95 + $0x58] sm:$0xff]
    %v108 = vld [vmem:[%s95 + $0x60] sm:$0xff]
    %v109 = vld [vmem:[%s95 + $0x68] sm:$0xff]
    %v110 = vld [vmem:[%s95 + $0x70] sm:$0xff]
    %v111 = vld [vmem:[%s95 + $0x78] sm:$0xff]
    %v112 = vld [vmem:[%s95 + $0x80] sm:$0xff]
    %v113 = vld [vmem:[%s95 + $0x88] sm:$0xff]
    %v132 = vunpack.c.l.b16 %v96
    %v133 = vunpack.c.h.b16 %v96
    %v134 = vunpack.c.l.b16 %v97
    %v135 = vunpack.c.h.b16 %v97
    %v136 = vunpack.c.l.b16 %v98
    %v137 = vunpack.c.h.b16 %v98
    %v138 = vunpack.c.l.b16 %v99
    %v139 = vunpack.c.h.b16 %v99
    %v140 = vunpack.c.l.b16 %v100
    %v141 = vunpack.c.h.b16 %v100
    %v142 = vunpack.c.l.b16 %v101
    %v143 = vunpack.c.h.b16 %v101
    %v144 = vunpack.c.l.b16 %v102
    %v145 = vunpack.c.h.b16 %v102
    %v146 = vunpack.c.l.b16 %v103
    %v147 = vunpack.c.h.b16 %v103
    %v148 = vunpack.c.l.b16 %v104
    %v149 = vunpack.c.h.b16 %v104
    %v150 = vunpack.c.l.b16 %v105
    %v151 = vunpack.c.h.b16 %v105
    %v152 = vunpack.c.l.b16 %v106
    %v153 = vunpack.c.h.b16 %v106
    %v154 = vunpack.c.l.b16 %v107
    %v155 = vunpack.c.h.b16 %v107
    %v156 = vunpack.c.l.b16 %v108
    %v157 = vunpack.c.h.b16 %v108
    %v158 = vunpack.c.l.b16 %v109
    %v159 = vunpack.c.h.b16 %v109
    %v160 = vunpack.c.l.b16 %v110
    %v161 = vunpack.c.h.b16 %v110
    %v162 = vunpack.c.l.b16 %v111
    %v163 = vunpack.c.h.b16 %v111
    %v164 = vunpack.c.l.b16 %v112
    %v165 = vunpack.c.h.b16 %v112
    %v166 = vunpack.c.l.b16 %v113
    %v167 = vunpack.c.h.b16 %v113
    %v168 = vpack.c.b16 %v136, %v132
    %v169 = vpack.c.b16 %v137, %v133
    %v170 = vpack.c.b16 %v138, %v134
    %v171 = vpack.c.b16 %v139, %v135
    %v172 = vpack.c.b16 %v144, %v140
    %v173 = vpack.c.b16 %v145, %v141
    %v174 = vpack.c.b16 %v146, %v142
    %v175 = vpack.c.b16 %v147, %v143
    %v176 = vpack.c.b16 %v152, %v148
    %v177 = vpack.c.b16 %v153, %v149
    %v178 = vpack.c.b16 %v154, %v150
    %v179 = vpack.c.b16 %v155, %v151
    %v180 = vpack.c.b16 %v160, %v156
    %v181 = vpack.c.b16 %v161, %v157
    %v182 = vpack.c.b16 %v162, %v158
    %v183 = vpack.c.b16 %v163, %v159
    %v184 = vpack.c.b16 %v164, %v164
    %v185 = vpack.c.b16 %v165, %v165
    %v186 = vpack.c.b16 %v166, %v166
    %v187 = vpack.c.b16 %v167, %v167
    %vm204 = vcmask 588800
    %v206 = vsel %vm204, %v92, 0
    %v209 = vsel %vm204, %v93, 0
    %v212 = vsel %vm204, %v94, 0
    %vm214 = vcmask 1043456
    %v216 = vsel %vm214, %v184, 0
    %v219 = vsel %vm214, %v185, 0
    %v222 = vsel %vm214, %v186, 0
    %v225 = vsel %vm214, %v187, 0
    %227 = vmatpush.bf16.msra.mxu0 0
    %228 = vmatpush.bf16.msra.mxu0 0
    %229 = vmatpush.bf16.msra.mxu0 0
    %230 = vmatpush.bf16.msra.mxu0 %v216
    %231 = vmatpush.bf16.msra.mxu0 %v180
    %232 = vmatpush.bf16.msra.mxu0 %v176
    %233 = vmatpush.bf16.msra.mxu0 %v172
    %234 = vmatpush.bf16.msra.mxu0 %v168
    %235 = vmatmul.bf16.gmra.mxu0 %v206
    %v236 = vpop.f32.mrf.mxu0
    %v237 = vadd.f32 0.0, %v236
    %v238 = vpop.f32.mrf.mxu0
    %v239 = vadd.f32 0.0, %v238
    %240 = vmatmul.bf16.gmra.mxu0 %v209
    %v241 = vpop.f32.mrf.mxu0
    %v242 = vadd.f32 0.0, %v241
    %v243 = vpop.f32.mrf.mxu0
    %v244 = vadd.f32 0.0, %v243
    %245 = vmatmul.bf16.gmra.mxu0 %v212
    %v246 = vpop.f32.mrf.mxu0
    %v247 = vadd.f32 0.0, %v246
    %v248 = vpop.f32.mrf.mxu0
    %249 = vdwg.mxu0
    %250 = vmatpush.bf16.msra.mxu0 0
    %251 = vmatpush.bf16.msra.mxu0 0
    %252 = vmatpush.bf16.msra.mxu0 0
    %253 = vmatpush.bf16.msra.mxu0 %v219
    %254 = vmatpush.bf16.msra.mxu0 %v181
    %255 = vmatpush.bf16.msra.mxu0 %v177
    %256 = vmatpush.bf16.msra.mxu0 %v173
    %257 = vmatpush.bf16.msra.mxu0 %v169
    %258 = vmatmul.bf16.gmra.mxu0 %v206
    %v259 = vpop.f32.mrf.mxu0
    %v260 = vadd.f32 0.0, %v259
    %v261 = vpop.f32.mrf.mxu0
    %v262 = vadd.f32 0.0, %v261
    %263 = vmatmul.bf16.gmra.mxu0 %v209
    %v264 = vpop.f32.mrf.mxu0
    %v265 = vadd.f32 0.0, %v264
    %v266 = vpop.f32.mrf.mxu0
    %v267 = vadd.f32 0.0, %v266
    %268 = vmatmul.bf16.gmra.mxu0 %v212
    %v269 = vpop.f32.mrf.mxu0
    %v270 = vadd.f32 0.0, %v269
    %v271 = vpop.f32.mrf.mxu0
    %272 = vdwg.mxu0
    %273 = vmatpush.bf16.msra.mxu0 0
    %274 = vmatpush.bf16.msra.mxu0 0
    %275 = vmatpush.bf16.msra.mxu0 0
    %276 = vmatpush.bf16.msra.mxu0 %v222
    %277 = vmatpush.bf16.msra.mxu0 %v182
    %278 = vmatpush.bf16.msra.mxu0 %v178
    %279 = vmatpush.bf16.msra.mxu0 %v174
    %280 = vmatpush.bf16.msra.mxu0 %v170
    %281 = vmatmul.bf16.gmra.mxu0 %v206
    %v282 = vpop.f32.mrf.mxu0
    %v283 = vadd.f32 0.0, %v282
    %v284 = vpop.f32.mrf.mxu0
    %v285 = vadd.f32 0.0, %v284
    %286 = vmatmul.bf16.gmra.mxu0 %v209
    %v287 = vpop.f32.mrf.mxu0
    %v288 = vadd.f32 0.0, %v287
    %v289 = vpop.f32.mrf.mxu0
    %v290 = vadd.f32 0.0, %v289
    %291 = vmatmul.bf16.gmra.mxu0 %v212
    %v292 = vpop.f32.mrf.mxu0
    %v293 = vadd.f32 0.0, %v292
    %v294 = vpop.f32.mrf.mxu0
    %295 = vdwg.mxu0
    %296 = vmatpush.bf16.msra.mxu0 0
    %297 = vmatpush.bf16.msra.mxu0 0
    %298 = vmatpush.bf16.msra.mxu0 0
    %299 = vmatpush.bf16.msra.mxu0 %v225
    %300 = vmatpush.bf16.msra.mxu0 %v183
    %301 = vmatpush.bf16.msra.mxu0 %v179
    %302 = vmatpush.bf16.msra.mxu0 %v175
    %303 = vmatpush.bf16.msra.mxu0 %v171
    %304 = vmatmul.bf16.gmra.mxu0 %v206
    %v305 = vpop.f32.mrf.mxu0
    %v306 = vadd.f32 0.0, %v305
    %v307 = vpop.f32.mrf.mxu0
    %v308 = vadd.f32 0.0, %v307
    %309 = vmatmul.bf16.gmra.mxu0 %v209
    %v310 = vpop.f32.mrf.mxu0
    %v311 = vadd.f32 0.0, %v310
    %v312 = vpop.f32.mrf.mxu0
    %v313 = vadd.f32 0.0, %v312
    %314 = vmatmul.bf16.gmra.mxu0 %v212
    %v315 = vpop.f32.mrf.mxu0
    %v316 = vadd.f32 0.0, %v315
    %v317 = vpop.f32.mrf.mxu0
    %318 = vdwg.mxu0
    %v337 = vunpack.c.l.b16 %v69
    %v338 = vunpack.c.h.b16 %v69
    %v339 = vunpack.c.l.b16 %v70
    %v340 = vunpack.c.h.b16 %v70
    %v341 = vunpack.c.l.b16 %v71
    %v342 = vunpack.c.h.b16 %v71
    %v343 = vunpack.c.l.b16 %v72
    %v344 = vunpack.c.h.b16 %v72
    %v345 = vunpack.c.l.b16 %v73
    %v346 = vunpack.c.h.b16 %v73
    %v347 = vunpack.c.l.b16 %v74
    %v348 = vunpack.c.h.b16 %v74
    %v349 = vunpack.c.l.b16 %v75
    %v350 = vunpack.c.h.b16 %v75
    %v351 = vunpack.c.l.b16 %v76
    %v352 = vunpack.c.h.b16 %v76
    %v353 = vunpack.c.l.b16 %v77
    %v354 = vunpack.c.h.b16 %v77
    %v355 = vunpack.c.l.b16 %v78
    %v356 = vunpack.c.h.b16 %v78
    %v357 = vunpack.c.l.b16 %v79
    %v358 = vunpack.c.h.b16 %v79
    %v359 = vunpack.c.l.b16 %v80
    %v360 = vunpack.c.h.b16 %v80
    %v361 = vunpack.c.l.b16 %v81
    %v362 = vunpack.c.h.b16 %v81
    %v363 = vunpack.c.l.b16 %v82
    %v364 = vunpack.c.h.b16 %v82
    %v365 = vunpack.c.l.b16 %v83
    %v366 = vunpack.c.h.b16 %v83
    %v367 = vunpack.c.l.b16 %v84
    %v368 = vunpack.c.h.b16 %v84
    %v369 = vunpack.c.l.b16 %v85
    %v370 = vunpack.c.h.b16 %v85
    %v371 = vunpack.c.l.b16 %v86
    %v372 = vunpack.c.h.b16 %v86
    %v373 = vpack.c.b16 %v341, %v337
    %v374 = vpack.c.b16 %v342, %v338
    %v375 = vpack.c.b16 %v343, %v339
    %v376 = vpack.c.b16 %v344, %v340
    %v377 = vpack.c.b16 %v349, %v345
    %v378 = vpack.c.b16 %v350, %v346
    %v379 = vpack.c.b16 %v351, %v347
    %v380 = vpack.c.b16 %v352, %v348
    %v381 = vpack.c.b16 %v357, %v353
    %v382 = vpack.c.b16 %v358, %v354
    %v383 = vpack.c.b16 %v359, %v355
    %v384 = vpack.c.b16 %v360, %v356
    %v385 = vpack.c.b16 %v365, %v361
    %v386 = vpack.c.b16 %v366, %v362
    %v387 = vpack.c.b16 %v367, %v363
    %v388 = vpack.c.b16 %v368, %v364
    %v389 = vpack.c.b16 %v369, %v369
    %v390 = vpack.c.b16 %v370, %v370
    %v391 = vpack.c.b16 %v371, %v371
    %v392 = vpack.c.b16 %v372, %v372
    %v410 = vsel %vm204, %v66, 0
    %v413 = vsel %vm204, %v67, 0
    %v416 = vsel %vm204, %v68, 0
    %v419 = vsel %vm214, %v389, 0
    %v422 = vsel %vm214, %v390, 0
    %v425 = vsel %vm214, %v391, 0
    %v428 = vsel %vm214, %v392, 0
    %430 = vmatpush.bf16.msra.mxu0 0
    %431 = vmatpush.bf16.msra.mxu0 0
    %432 = vmatpush.bf16.msra.mxu0 0
    %433 = vmatpush.bf16.msra.mxu0 %v419
    %434 = vmatpush.bf16.msra.mxu0 %v385
    %435 = vmatpush.bf16.msra.mxu0 %v381
    %436 = vmatpush.bf16.msra.mxu0 %v377
    %437 = vmatpush.bf16.msra.mxu0 %v373
    %438 = vmatmul.bf16.gmra.mxu0 %v410
    %v439 = vpop.f32.mrf.mxu0
    %v440 = vadd.f32 %v237, %v439
    %v441 = vpop.f32.mrf.mxu0
    %v442 = vadd.f32 %v239, %v441
    %443 = vmatmul.bf16.gmra.mxu0 %v413
    %v444 = vpop.f32.mrf.mxu0
    %v445 = vadd.f32 %v242, %v444
    %v446 = vpop.f32.mrf.mxu0
    %v447 = vadd.f32 %v244, %v446
    %448 = vmatmul.bf16.gmra.mxu0 %v416
    %v449 = vpop.f32.mrf.mxu0
    %v450 = vadd.f32 %v247, %v449
    %v451 = vpop.f32.mrf.mxu0
    %452 = vdwg.mxu0
    %453 = vmatpush.bf16.msra.mxu0 0
    %454 = vmatpush.bf16.msra.mxu0 0
    %455 = vmatpush.bf16.msra.mxu0 0
    %456 = vmatpush.bf16.msra.mxu0 %v422
    %457 = vmatpush.bf16.msra.mxu0 %v386
    %458 = vmatpush.bf16.msra.mxu0 %v382
    %459 = vmatpush.bf16.msra.mxu0 %v378
    %460 = vmatpush.bf16.msra.mxu0 %v374
    %461 = vmatmul.bf16.gmra.mxu0 %v410
    %v462 = vpop.f32.mrf.mxu0
    %v463 = vadd.f32 %v260, %v462
    %v464 = vpop.f32.mrf.mxu0
    %v465 = vadd.f32 %v262, %v464
    %466 = vmatmul.bf16.gmra.mxu0 %v413
    %v467 = vpop.f32.mrf.mxu0
    %v468 = vadd.f32 %v265, %v467
    %v469 = vpop.f32.mrf.mxu0
    %v470 = vadd.f32 %v267, %v469
    %471 = vmatmul.bf16.gmra.mxu0 %v416
    %v472 = vpop.f32.mrf.mxu0
    %v473 = vadd.f32 %v270, %v472
    %v474 = vpop.f32.mrf.mxu0
    %475 = vdwg.mxu0
    %476 = vmatpush.bf16.msra.mxu0 0
    %477 = vmatpush.bf16.msra.mxu0 0
    %478 = vmatpush.bf16.msra.mxu0 0
    %479 = vmatpush.bf16.msra.mxu0 %v425
    %480 = vmatpush.bf16.msra.mxu0 %v387
    %481 = vmatpush.bf16.msra.mxu0 %v383
    %482 = vmatpush.bf16.msra.mxu0 %v379
    %483 = vmatpush.bf16.msra.mxu0 %v375
    %484 = vmatmul.bf16.gmra.mxu0 %v410
    %v485 = vpop.f32.mrf.mxu0
    %v486 = vadd.f32 %v283, %v485
    %v487 = vpop.f32.mrf.mxu0
    %v488 = vadd.f32 %v285, %v487
    %489 = vmatmul.bf16.gmra.mxu0 %v413
    %v490 = vpop.f32.mrf.mxu0
    %v491 = vadd.f32 %v288, %v490
    %v492 = vpop.f32.mrf.mxu0
    %v493 = vadd.f32 %v290, %v492
    %494 = vmatmul.bf16.gmra.mxu0 %v416
    %v495 = vpop.f32.mrf.mxu0
    %v496 = vadd.f32 %v293, %v495
    %v497 = vpop.f32.mrf.mxu0
    %498 = vdwg.mxu0
    %499 = vmatpush.bf16.msra.mxu0 0
    %500 = vmatpush.bf16.msra.mxu0 0
    %501 = vmatpush.bf16.msra.mxu0 0
    %502 = vmatpush.bf16.msra.mxu0 %v428
    %503 = vmatpush.bf16.msra.mxu0 %v388
    %504 = vmatpush.bf16.msra.mxu0 %v384
    %505 = vmatpush.bf16.msra.mxu0 %v380
    %506 = vmatpush.bf16.msra.mxu0 %v376
    %507 = vmatmul.bf16.gmra.mxu0 %v410
    %v508 = vpop.f32.mrf.mxu0
    %v509 = vadd.f32 %v306, %v508
    %v510 = vpop.f32.mrf.mxu0
    %v511 = vadd.f32 %v308, %v510
    %512 = vmatmul.bf16.gmra.mxu0 %v413
    %v513 = vpop.f32.mrf.mxu0
    %v514 = vadd.f32 %v311, %v513
    %v515 = vpop.f32.mrf.mxu0
    %v516 = vadd.f32 %v313, %v515
    %517 = vmatmul.bf16.gmra.mxu0 %v416
    %v518 = vpop.f32.mrf.mxu0
    %v519 = vadd.f32 %v316, %v518
    %v520 = vpop.f32.mrf.mxu0
    %521 = vdwg.mxu0
    %v522 = vld [vmem:[#allocation2 + $0x2] sm:$0xff]
    %v523 = vld [vmem:[#allocation2 + $0xa] sm:$0xff]
    %v524 = vld [vmem:[#allocation2 + $0x12] sm:$0xff]
    %v525 = vld [vmem:[#allocation2 + $0x1a] sm:$0xff]
    %v526 = vld [vmem:[#allocation2 + $0x22] sm:$0xff]
    %v527 = vpack.c.bf16 %v523, %v522
    %v528 = vpack.c.bf16 %v525, %v524
    %v529 = vpack.c.bf16 %v526, %v526
    %s530 = scalar_lea.vmem [#allocation5], 288
    %v531 = vld [vmem:[%s530] sm:$0xff]
    %v532 = vld [vmem:[%s530 + $0x8] sm:$0xff]
    %v533 = vld [vmem:[%s530 + $0x10] sm:$0xff]
    %v534 = vld [vmem:[%s530 + $0x18] sm:$0xff]
    %v535 = vld [vmem:[%s530 + $0x20] sm:$0xff]
    %v536 = vld [vmem:[%s530 + $0x28] sm:$0xff]
    %v537 = vld [vmem:[%s530 + $0x30] sm:$0xff]
    %v538 = vld [vmem:[%s530 + $0x38] sm:$0xff]
    %v539 = vld [vmem:[%s530 + $0x40] sm:$0xff]
    %v540 = vld [vmem:[%s530 + $0x48] sm:$0xff]
    %v541 = vld [vmem:[%s530 + $0x50] sm:$0xff]
    %v542 = vld [vmem:[%s530 + $0x58] sm:$0xff]
    %v543 = vld [vmem:[%s530 + $0x60] sm:$0xff]
    %v544 = vld [vmem:[%s530 + $0x68] sm:$0xff]
    %v545 = vld [vmem:[%s530 + $0x70] sm:$0xff]
    %v546 = vld [vmem:[%s530 + $0x78] sm:$0xff]
    %v547 = vld [vmem:[%s530 + $0x80] sm:$0xff]
    %v548 = vld [vmem:[%s530 + $0x88] sm:$0xff]
    %v567 = vunpack.c.l.b16 %v531
    %v568 = vunpack.c.h.b16 %v531
    %v569 = vunpack.c.l.b16 %v532
    %v570 = vunpack.c.h.b16 %v532
    %v571 = vunpack.c.l.b16 %v533
    %v572 = vunpack.c.h.b16 %v533
    %v573 = vunpack.c.l.b16 %v534
    %v574 = vunpack.c.h.b16 %v534
    %v575 = vunpack.c.l.b16 %v535
    %v576 = vunpack.c.h.b16 %v535
    %v577 = vunpack.c.l.b16 %v536
    %v578 = vunpack.c.h.b16 %v536
    %v579 = vunpack.c.l.b16 %v537
    %v580 = vunpack.c.h.b16 %v537
    %v581 = vunpack.c.l.b16 %v538
    %v582 = vunpack.c.h.b16 %v538
    %v583 = vunpack.c.l.b16 %v539
    %v584 = vunpack.c.h.b16 %v539
    %v585 = vunpack.c.l.b16 %v540
    %v586 = vunpack.c.h.b16 %v540
    %v587 = vunpack.c.l.b16 %v541
    %v588 = vunpack.c.h.b16 %v541
    %v589 = vunpack.c.l.b16 %v542
    %v590 = vunpack.c.h.b16 %v542
    %v591 = vunpack.c.l.b16 %v543
    %v592 = vunpack.c.h.b16 %v543
    %v593 = vunpack.c.l.b16 %v544
    %v594 = vunpack.c.h.b16 %v544
    %v595 = vunpack.c.l.b16 %v545
    %v596 = vunpack.c.h.b16 %v545
    %v597 = vunpack.c.l.b16 %v546
    %v598 = vunpack.c.h.b16 %v546
    %v599 = vunpack.c.l.b16 %v547
    %v600 = vunpack.c.h.b16 %v547
    %v601 = vunpack.c.l.b16 %v548
    %v602 = vunpack.c.h.b16 %v548
    %v603 = vpack.c.b16 %v571, %v567
    %v604 = vpack.c.b16 %v572, %v568
    %v605 = vpack.c.b16 %v573, %v569
    %v606 = vpack.c.b16 %v574, %v570
    %v607 = vpack.c.b16 %v579, %v575
    %v608 = vpack.c.b16 %v580, %v576
    %v609 = vpack.c.b16 %v581, %v577
    %v610 = vpack.c.b16 %v582, %v578
    %v611 = vpack.c.b16 %v587, %v583
    %v612 = vpack.c.b16 %v588, %v584
    %v613 = vpack.c.b16 %v589, %v585
    %v614 = vpack.c.b16 %v590, %v586
    %v615 = vpack.c.b16 %v595, %v591
    %v616 = vpack.c.b16 %v596, %v592
    %v617 = vpack.c.b16 %v597, %v593
    %v618 = vpack.c.b16 %v598, %v594
    %v619 = vpack.c.b16 %v599, %v599
    %v620 = vpack.c.b16 %v600, %v600
    %v621 = vpack.c.b16 %v601, %v601
    %v622 = vpack.c.b16 %v602, %v602
    %v640 = vsel %vm204, %v527, 0
    %v643 = vsel %vm204, %v528, 0
    %v646 = vsel %vm204, %v529, 0
    %v649 = vsel %vm214, %v619, 0
    %v652 = vsel %vm214, %v620, 0
    %v655 = vsel %vm214, %v621, 0
    %v658 = vsel %vm214, %v622, 0
    %660 = vmatpush.bf16.msra.mxu0 0
    %661 = vmatpush.bf16.msra.mxu0 0
    %662 = vmatpush.bf16.msra.mxu0 0
    %663 = vmatpush.bf16.msra.mxu0 %v649
    %664 = vmatpush.bf16.msra.mxu0 %v615
    %665 = vmatpush.bf16.msra.mxu0 %v611
    %666 = vmatpush.bf16.msra.mxu0 %v607
    %667 = vmatpush.bf16.msra.mxu0 %v603
    %668 = vmatmul.bf16.gmra.mxu0 %v640
    %v669 = vpop.f32.mrf.mxu0
    %v670 = vadd.f32 0.0, %v669
    %v671 = vpop.f32.mrf.mxu0
    %v672 = vadd.f32 0.0, %v671
    %673 = vmatmul.bf16.gmra.mxu0 %v643
    %v674 = vpop.f32.mrf.mxu0
    %v675 = vadd.f32 0.0, %v674
    %v676 = vpop.f32.mrf.mxu0
    %v677 = vadd.f32 0.0, %v676
    %678 = vmatmul.bf16.gmra.mxu0 %v646
    %v679 = vpop.f32.mrf.mxu0
    %v680 = vadd.f32 0.0, %v679
    %v681 = vpop.f32.mrf.mxu0
    %682 = vdwg.mxu0
    %683 = vmatpush.bf16.msra.mxu0 0
    %684 = vmatpush.bf16.msra.mxu0 0
    %685 = vmatpush.bf16.msra.mxu0 0
    %686 = vmatpush.bf16.msra.mxu0 %v652
    %687 = vmatpush.bf16.msra.mxu0 %v616
    %688 = vmatpush.bf16.msra.mxu0 %v612
    %689 = vmatpush.bf16.msra.mxu0 %v608
    %690 = vmatpush.bf16.msra.mxu0 %v604
    %691 = vmatmul.bf16.gmra.mxu0 %v640
    %v692 = vpop.f32.mrf.mxu0
    %v693 = vadd.f32 0.0, %v692
    %v694 = vpop.f32.mrf.mxu0
    %v695 = vadd.f32 0.0, %v694
    %696 = vmatmul.bf16.gmra.mxu0 %v643
    %v697 = vpop.f32.mrf.mxu0
    %v698 = vadd.f32 0.0, %v697
    %v699 = vpop.f32.mrf.mxu0
    %v700 = vadd.f32 0.0, %v699
    %701 = vmatmul.bf16.gmra.mxu0 %v646
    %v702 = vpop.f32.mrf.mxu0
    %v703 = vadd.f32 0.0, %v702
    %v704 = vpop.f32.mrf.mxu0
    %705 = vdwg.mxu0
    %706 = vmatpush.bf16.msra.mxu0 0
    %707 = vmatpush.bf16.msra.mxu0 0
    %708 = vmatpush.bf16.msra.mxu0 0
    %709 = vmatpush.bf16.msra.mxu0 %v655
    %710 = vmatpush.bf16.msra.mxu0 %v617
    %711 = vmatpush.bf16.msra.mxu0 %v613
    %712 = vmatpush.bf16.msra.mxu0 %v609
    %713 = vmatpush.bf16.msra.mxu0 %v605
    %714 = vmatmul.bf16.gmra.mxu0 %v640
    %v715 = vpop.f32.mrf.mxu0
    %v716 = vadd.f32 0.0, %v715
    %v717 = vpop.f32.mrf.mxu0
    %v718 = vadd.f32 0.0, %v717
    %719 = vmatmul.bf16.gmra.mxu0 %v643
    %v720 = vpop.f32.mrf.mxu0
    %v721 = vadd.f32 0.0, %v720
    %v722 = vpop.f32.mrf.mxu0
    %v723 = vadd.f32 0.0, %v722
    %724 = vmatmul.bf16.gmra.mxu0 %v646
    %v725 = vpop.f32.mrf.mxu0
    %v726 = vadd.f32 0.0, %v725
    %v727 = vpop.f32.mrf.mxu0
    %728 = vdwg.mxu0
    %729 = vmatpush.bf16.msra.mxu0 0
    %730 = vmatpush.bf16.msra.mxu0 0
    %731 = vmatpush.bf16.msra.mxu0 0
    %732 = vmatpush.bf16.msra.mxu0 %v658
    %733 = vmatpush.bf16.msra.mxu0 %v618
    %734 = vmatpush.bf16.msra.mxu0 %v614
    %735 = vmatpush.bf16.msra.mxu0 %v610
    %736 = vmatpush.bf16.msra.mxu0 %v606
    %737 = vmatmul.bf16.gmra.mxu0 %v640
    %v738 = vpop.f32.mrf.mxu0
    %v739 = vadd.f32 0.0, %v738
    %v740 = vpop.f32.mrf.mxu0
    %v741 = vadd.f32 0.0, %v740
    %742 = vmatmul.bf16.gmra.mxu0 %v643
    %v743 = vpop.f32.mrf.mxu0
    %v744 = vadd.f32 0.0, %v743
    %v745 = vpop.f32.mrf.mxu0
    %v746 = vadd.f32 0.0, %v745
    %747 = vmatmul.bf16.gmra.mxu0 %v646
    %v748 = vpop.f32.mrf.mxu0
    %v749 = vadd.f32 0.0, %v748
    %v750 = vpop.f32.mrf.mxu0
    %751 = vdwg.mxu0
    %v752 = vadd.f32 %v440, %v670
    %v753 = vadd.f32 %v463, %v693
    %v754 = vadd.f32 %v486, %v716
    %v755 = vadd.f32 %v509, %v739
    %v756 = vadd.f32 %v442, %v672
    %v757 = vadd.f32 %v465, %v695
    %v758 = vadd.f32 %v488, %v718
    %v759 = vadd.f32 %v511, %v741
    %v760 = vadd.f32 %v445, %v675
    %v761 = vadd.f32 %v468, %v698
    %v762 = vadd.f32 %v491, %v721
    %v763 = vadd.f32 %v514, %v744
    %v764 = vadd.f32 %v447, %v677
    %v765 = vadd.f32 %v470, %v700
    %v766 = vadd.f32 %v493, %v723
    %v767 = vadd.f32 %v516, %v746
    %v768 = vadd.f32 %v450, %v680
    %v769 = vadd.f32 %v473, %v703
    %v770 = vadd.f32 %v496, %v726
    %v771 = vadd.f32 %v519, %v749
    %v772 = vld [vmem:[#allocation7] sm:$0xf]
    %v774 = vperm.slane %v772, 0
    %v775 = vperm.slane %v772, 1
    %v776 = vperm.slane %v772, 2
    %v777 = vperm.slane %v772, 3
    %v782 = vadd.f32 %v752, %v774
    %v783 = vadd.f32 %v753, %v775
    %v784 = vadd.f32 %v754, %v776
    %v785 = vadd.f32 %v755, %v777
    %v786 = vadd.f32 %v756, %v774
    %v787 = vadd.f32 %v757, %v775
    %v788 = vadd.f32 %v758, %v776
    %v789 = vadd.f32 %v759, %v777
    %v790 = vadd.f32 %v760, %v774
    %v791 = vadd.f32 %v761, %v775
    %v792 = vadd.f32 %v762, %v776
    %v793 = vadd.f32 %v763, %v777
    %v794 = vadd.f32 %v764, %v774
    %v795 = vadd.f32 %v765, %v775
    %v796 = vadd.f32 %v766, %v776
    %v797 = vadd.f32 %v767, %v777
    %v798 = vadd.f32 %v768, %v774
    %v799 = vadd.f32 %v769, %v775
    %v800 = vadd.f32 %v770, %v776
    %v801 = vadd.f32 %v771, %v777
    %v802 = vmax.f32 %v782, 0.0
    %v803 = vmax.f32 %v783, 0.0
    %v804 = vmax.f32 %v784, 0.0
    %v805 = vmax.f32 %v785, 0.0
    %v806 = vmax.f32 %v786, 0.0
    %v807 = vmax.f32 %v787, 0.0
    %v808 = vmax.f32 %v788, 0.0
    %v809 = vmax.f32 %v789, 0.0
    %v810 = vmax.f32 %v790, 0.0
    %v811 = vmax.f32 %v791, 0.0
    %v812 = vmax.f32 %v792, 0.0
    %v813 = vmax.f32 %v793, 0.0
    %v814 = vmax.f32 %v794, 0.0
    %v815 = vmax.f32 %v795, 0.0
    %v816 = vmax.f32 %v796, 0.0
    %v817 = vmax.f32 %v797, 0.0
    %v818 = vmax.f32 %v798, 0.0
    %v819 = vmax.f32 %v799, 0.0
    %v820 = vmax.f32 %v800, 0.0
    %v821 = vmax.f32 %v801, 0.0
    %822 = vst [vmem:[#allocation8] sm:$0xff] %v802
    %823 = vst [vmem:[#allocation8 + $0x8] sm:$0xff] %v803
    %824 = vst [vmem:[#allocation8 + $0x10] sm:$0xff] %v804
    %825 = vst [vmem:[#allocation8 + $0x18] sm:$0xff] %v805
    %826 = vst [vmem:[#allocation8 + $0x20] sm:$0xff] %v806
    %827 = vst [vmem:[#allocation8 + $0x28] sm:$0xff] %v807
    %828 = vst [vmem:[#allocation8 + $0x30] sm:$0xff] %v808
    %829 = vst [vmem:[#allocation8 + $0x38] sm:$0xff] %v809
    %830 = vst [vmem:[#allocation8 + $0x40] sm:$0xff] %v810
    %831 = vst [vmem:[#allocation8 + $0x48] sm:$0xff] %v811
    %832 = vst [vmem:[#allocation8 + $0x50] sm:$0xff] %v812
    %833 = vst [vmem:[#allocation8 + $0x58] sm:$0xff] %v813
    %834 = vst [vmem:[#allocation8 + $0x60] sm:$0xff] %v814
    %835 = vst [vmem:[#allocation8 + $0x68] sm:$0xff] %v815
    %836 = vst [vmem:[#allocation8 + $0x70] sm:$0xff] %v816
    %837 = vst [vmem:[#allocation8 + $0x78] sm:$0xff] %v817
    %838 = vst [vmem:[#allocation8 + $0x80] sm:$0xff] %v818
    %839 = vst [vmem:[#allocation8 + $0x88] sm:$0xff] %v819
    %840 = vst [vmem:[#allocation8 + $0x90] sm:$0xff] %v820
    %841 = vst [vmem:[#allocation8 + $0x98] sm:$0xff] %v821
    // Predicated region
    $region26: #{tpu_custom_call.1} parent=1 // pred_check
      _
    $region27: #{tpu_custom_call.1} parent=1 // pred_check_branch
      %843 = sbr.rel (0) target = $region29
    $region28: #{tpu_custom_call.1} parent=1 // pred_region
      %845 = vsyncadd [#allocation4], 0
      %s846 = sshll.u32 [#allocation8], 4
      %s847 = int_to_ptr.vmem [resolvable:$true] %s846
      %s848 = sshll.u32 %s3, 4
      %s849 = int_to_ptr.hbm [resolvable:$true] %s848
      %854 = dma.vmem_to_hbm [thread:$0]  %s847, 2560, %s849, [#allocation4], 512, 512, 32
    $region29: #{tpu_custom_call.1} parent=1 // pred_fallthru
      _
    // Predicated region
    $region30: #{tpu_custom_call.1} parent=1 // pred_check
      _
    $region31: #{tpu_custom_call.1} parent=1 // pred_check_branch
      %856 = sbr.rel (0) target = $region33
    $region32: #{tpu_custom_call.1} parent=1 // pred_region
      %858 = dma.done [#allocation4], 2560
    $region33: #{tpu_custom_call.1} parent=1 // pred_fallthru
      _
    %859 = vsyncpa [#allocation3], 1
    %860 = vsyncpa [#allocation6], 1
    %861 = vsyncpa [#allocation4], 1

</llo_original>
